<compile_context>
chip_gen: v7x
topology: tpu7x:2x2x1
jax: 0.10.0
libtpu: 0.0.40
codegen_flags: <defaults>
</compile_context>

<pallas_src>
import functools

import jax
import jax.numpy as jnp
from jax import lax
from jax.experimental import pallas as pl
from jax.experimental.pallas import tpu as pltpu


def _cdiv(a, b):
    return (a + b - 1) // b


def _round_up(v, m):
    return _cdiv(v, m) * m


def _moment_kernel(x_ref, wf_ref, bf_ref, w2_ref, b2_ref, out_ref, acc_ref,
                   *, seq_len, t_tile, ragged_t):
    """grid = (batch tiles [parallel], time tiles [arbitrary reduction])."""
    t = pl.program_id(1)

    @pl.when(t == 0)
    def _init():
        acc_ref[...] = jnp.zeros_like(acc_ref)

    # x block is (TB, TT, C) in the module's native (B, T, C) layout.  The
    # PyTorch permute(0, 2, 1) only re-lays-out x for the (frozen) pooling
    # embedder, so mean over time is taken directly over axis=1 here.
    xb = x_ref[...]                                           # f32
    if ragged_t:
        # Mask out-of-range time rows of the ragged final T tile.
        valid = seq_len - t * t_tile                          # >= t_tile except last
        mask = lax.broadcasted_iota(jnp.int32, xb.shape, 1) < valid
        xb = jnp.where(mask, xb, 0.0)
    acc_ref[...] += jnp.sum(xb, axis=1)                       # f32 time-sum accumulator

    @pl.when(t == pl.num_programs(1) - 1)
    def _finalize():
        pooled = acc_ref[...] * (1.0 / seq_len)               # (TB, C) mean over time
        # Folded (frozen embedder + classifier layer 1), then ReLU (f32).
        h = jnp.dot(pooled.astype(wf_ref.dtype), wf_ref[...],
                    preferred_element_type=jnp.float32) + bf_ref[...]
        h = jnp.maximum(h, 0.0)
        # Classifier layer 2 into a lane-dense padded (TB, N_pad) block.
        out_ref[...] = (jnp.dot(h.astype(w2_ref.dtype), w2_ref[...],
                                preferred_element_type=jnp.float32)
                        + b2_ref[...])


@functools.partial(jax.jit, static_argnames=("use_bf16",))
def moment_forward(x, params, use_bf16=False):
    """x: (B, T, C) float32; returns logits (B, num_classes)."""
    wemb, bemb, w1, b1, w2, b2 = params
    B, T, C = x.shape
    H = w1.shape[1]                       # 256
    N = w2.shape[1]                       # num_classes
    N_pad = _round_up(max(N, 128), 128)   # lane-dense output width

    # --- Algebraic fold of the frozen linear embedder into classifier layer 1.
    w_fold = wemb @ w1                    # (C, H)
    b_fold = bemb @ w1 + b1               # (1, H)

    # --- Lane-dense padding of the final layer (num_classes -> N_pad).
    w2p = jnp.zeros((H, N_pad), jnp.float32).at[:, :N].set(w2)
    b2p = jnp.zeros((1, N_pad), jnp.float32).at[:, :N].set(b2)

    mm_dtype = jnp.bfloat16 if use_bf16 else jnp.float32
    itemsize_w = 2 if use_bf16 else 4
    w_fold = w_fold.astype(mm_dtype)
    w2p = w2p.astype(mm_dtype)

    # --- Only pad batch up to 8 rows when B < 8 (a few KB); never pad to TB.
    B_eff = max(B, 8)
    if B_eff != B:
        x = jnp.pad(x, ((0, B_eff - B), (0, 0), (0, 0)))

    # --- Batch tile: multiple of 8 sublanes; aim for >=4 grid steps when the
    # batch allows (v7x: 2 TensorCores + pipelining), cap at 512 rows.
    TB = max(8, min(_round_up(_cdiv(B_eff, 4), 8), 512, _round_up(B_eff, 8)))

    # --- Time tile: full T if the double-buffered x tile fits the budget,
    # otherwise a multiple-of-8 chunk of T (second, "arbitrary" grid axis).
    # 24 MiB for both x pipeline buffers keeps total VMEM v7x (64 MiB) safe.
    x_buf_budget = 24 << 20

    def _tt_for(tb):
        tt_max = x_buf_budget // (2 * tb * C * 4)
        if tt_max >= T:
            return T
        return max(8, (tt_max // 8) * 8)

    TT = _tt_for(TB)
    while TB > 8 and 2 * TB * TT * C * 4 > x_buf_budget:
        TB = max(8, ((TB // 2) // 8) * 8)
        TT = _tt_for(TB)

    nb = _cdiv(B_eff, TB)          # ragged final batch tile handled by Pallas
    nt = _cdiv(T, TT)
    ragged_t = (T % TT) != 0
    grid = (nb, nt)

    # --- VMEM accounting: fail loudly instead of silently clamping below need.
    vmem_bytes = (2 * TB * TT * C * 4                                   # x (dbl buf)
                  + 2 * ((C * H + H * N_pad) * itemsize_w
                         + (H + N_pad) * 4)                             # weights/bias
                  + 2 * TB * N_pad * 4                                  # out (dbl buf)
                  + TB * max(C, 128) * 4                                # acc scratch
                  + (2 << 20))                                          # slack
    if vmem_bytes > (48 << 20):   # safe ceiling on every generation (v7x = 64 MiB)
        raise ValueError(f"Moment kernel tile does not fit VMEM: {vmem_bytes} bytes")
    vmem_limit = int(min(max(vmem_bytes, 16 << 20), 64 << 20))

    flops = int(2 * B * (C * H + H * N_pad) + B * T * C)
    bytes_accessed = int(B * T * C * 4
                         + (C * H + H * N_pad) * itemsize_w
                         + (H + N_pad) * 4
                         + B * N_pad * 4)

    kernel = functools.partial(_moment_kernel, seq_len=T, t_tile=TT,
                               ragged_t=ragged_t)

    out = pl.pallas_call(
        kernel,
        out_shape=jax.ShapeDtypeStruct((B_eff, N_pad), jnp.float32),
        grid_spec=pltpu.PrefetchScalarGridSpec(
            num_scalar_prefetch=0,
            grid=grid,
            in_specs=[
                pl.BlockSpec((TB, TT, C), lambda i, t: (i, t, 0)),   # x (streamed once)
                pl.BlockSpec((C, H), lambda i, t: (0, 0)),           # W_fold (resident)
                pl.BlockSpec((1, H), lambda i, t: (0, 0)),           # b_fold
                pl.BlockSpec((H, N_pad), lambda i, t: (0, 0)),       # W2 (padded)
                pl.BlockSpec((1, N_pad), lambda i, t: (0, 0)),       # b2 (padded)
            ],
            out_specs=pl.BlockSpec((TB, N_pad), lambda i, t: (i, 0)),
            scratch_shapes=[pltpu.VMEM((TB, C), jnp.float32)],       # time-sum acc
        ),
        compiler_params=pltpu.CompilerParams(
            dimension_semantics=("parallel", "arbitrary"),
            vmem_limit_bytes=vmem_limit,
        ),
        cost_estimate=pl.CostEstimate(
            flops=flops, transcendentals=0, bytes_accessed=bytes_accessed),
    )(x, w_fold, b_fold, w2p, b2p)

    return out[:B, :N]


def make_params(key, n_channels, embedding_dim, hidden, num_classes):
    k = jax.random.split(key, 6)
    # frozen surrogate embedder params
    wemb = jax.random.normal(k[0], (n_channels, embedding_dim), jnp.float32) * 0.05
    bemb = jax.random.normal(k[1], (1, embedding_dim), jnp.float32) * 0.01
    # classifier params (nn.Linear-style, stored transposed for x @ W)
    w1 = jax.random.normal(k[2], (embedding_dim, hidden), jnp.float32) * 0.05
    b1 = jax.random.normal(k[3], (1, hidden), jnp.float32) * 0.01
    w2 = jax.random.normal(k[4], (hidden, num_classes), jnp.float32) * 0.05
    b2 = jax.random.normal(k[5], (1, num_classes), jnp.float32) * 0.01
    return wemb, bemb, w1, b1, w2, b2


def reference_forward(x, params):
    """Unfolded f32 reference matching the module's forward semantics."""
    wemb, bemb, w1, b1, w2, b2 = params
    pooled = jnp.mean(x, axis=1)            # mean over time (== permute + pool)
    emb = pooled @ wemb + bemb
    h = jnp.maximum(emb @ w1 + b1, 0.0)
    return h @ w2 + b2


if __name__ == "__main__":
    key = jax.random.PRNGKey(0)
    B, T, C = 2, 16, 8          # small shapes: batch=2, seq=16, channels=8
    embedding_dim = 512
    hidden = 256
    num_classes = 10

    kx, kp = jax.random.split(key)
    x = jax.random.normal(kx, (B, T, C), jnp.float32)
    params = make_params(kp, C, embedding_dim, hidden, num_classes)

    ref = reference_forward(x, params)

    # Default f32 path: exact (the fold is pure linear-algebra reassociation).
    out_f32 = jax.block_until_ready(moment_forward(x, params))
    assert out_f32.shape == (B, num_classes)
    assert jnp.allclose(out_f32, ref, atol=1e-4, rtol=1e-4), "f32 mismatch vs reference"

    # Optional bf16-weight MXU path: f32 accumulation, looser tolerance.
    out_bf16 = jax.block_until_ready(moment_forward(x, params, use_bf16=True))
    assert out_bf16.shape == (B, num_classes)
    assert jnp.allclose(out_bf16, ref, atol=2e-2, rtol=2e-2), "bf16 mismatch vs reference"

    print("KERNEL_OK")
</pallas_src>

<mosaic_0001>
module attributes {stable_mosaic.version = 11 : i64} {
  func.func @_moment_kernel(%arg0: i32, %arg1: i32, %arg2: memref<8x16x8xf32, #tpu.memory_space<vmem>>, %arg3: memref<8x256xf32, #tpu.memory_space<vmem>>, %arg4: memref<1x256xf32, #tpu.memory_space<vmem>>, %arg5: memref<256x128xf32, #tpu.memory_space<vmem>>, %arg6: memref<1x128xf32, #tpu.memory_space<vmem>>, %arg7: memref<8x128xf32, #tpu.memory_space<vmem>>, %arg8: memref<8x8xf32, #tpu.memory_space<vmem>>) attributes {dimension_semantics = [#tpu.dimension_semantics<parallel>, #tpu.dimension_semantics<arbitrary>], iteration_bounds = array<i64: 1, 1>, scalar_prefetch = 0 : i64, scratch_operands = 1 : i64, tpu.core_type = #tpu.core_type<tc>, window_params = [{transform_indices = @transform_0, window_bounds = array<i64: 8, 16, 8>}, {pipeline_mode = #tpu.pipeline_mode<synchronous>, transform_indices = @transform_1, window_bounds = array<i64: 8, 256>}, {pipeline_mode = #tpu.pipeline_mode<synchronous>, transform_indices = @transform_2, window_bounds = array<i64: 1, 256>}, {pipeline_mode = #tpu.pipeline_mode<synchronous>, transform_indices = @transform_3, window_bounds = array<i64: 256, 128>}, {pipeline_mode = #tpu.pipeline_mode<synchronous>, transform_indices = @transform_4, window_bounds = array<i64: 1, 128>}, {transform_indices = @transform_5, window_bounds = array<i64: 8, 128>}]} {
    %c0_i32 = arith.constant 0 : i32
    %0 = arith.cmpi eq, %arg1, %c0_i32 : i32
    %1 = arith.extui %0 : i1 to i32
    %c0_i32_0 = arith.constant 0 : i32
    %2 = arith.cmpi ne, %1, %c0_i32_0 : i32
    scf.if %2 {
      %cst_9 = arith.constant 0.000000e+00 : f32
      %11 = vector.broadcast %cst_9 : f32 to vector<8x8xf32>
      %c0_10 = arith.constant 0 : index
      %c0_11 = arith.constant 0 : index
      %12 = vector.load %arg8[%c0_10, %c0_11] : memref<8x8xf32, #tpu.memory_space<vmem>>, vector<8x8xf32>
      tpu.vector_store %arg8[%c0_10, %c0_11], %11 {strides = array<i32>} : memref<8x8xf32, #tpu.memory_space<vmem>>, vector<8x8xf32>,
    } else {
    }
    %c0 = arith.constant 0 : index
    %c0_1 = arith.constant 0 : index
    %c0_2 = arith.constant 0 : index
    %3 = vector.load %arg2[%c0, %c0_1, %c0_2] : memref<8x16x8xf32, #tpu.memory_space<vmem>>, vector<8x16x8xf32>
    %c0_3 = arith.constant 0 : index
    %c0_4 = arith.constant 0 : index
    %4 = vector.load %arg8[%c0_3, %c0_4] : memref<8x8xf32, #tpu.memory_space<vmem>>, vector<8x8xf32>
    %cst = arith.constant dense<0.000000e+00> : vector<8x8xf32>
    %5 = vector.multi_reduction <add>, %3, %cst [1] : vector<8x16x8xf32> to vector<8x8xf32>
    %6 = arith.addf %4, %5 : vector<8x8xf32>
    %c0_5 = arith.constant 0 : index
    %c0_6 = arith.constant 0 : index
    %7 = vector.load %arg8[%c0_5, %c0_6] : memref<8x8xf32, #tpu.memory_space<vmem>>, vector<8x8xf32>
    tpu.vector_store %arg8[%c0_5, %c0_6], %6 {strides = array<i32>} : memref<8x8xf32, #tpu.memory_space<vmem>>, vector<8x8xf32>,
    %c0_i32_7 = arith.constant 0 : i32
    %8 = arith.cmpi eq, %arg1, %c0_i32_7 : i32
    %9 = arith.extui %8 : i1 to i32
    %c0_i32_8 = arith.constant 0 : i32
    %10 = arith.cmpi ne, %9, %c0_i32_8 : i32
    scf.if %10 {
      %c0_9 = arith.constant 0 : index
      %c0_10 = arith.constant 0 : index
      %11 = vector.load %arg8[%c0_9, %c0_10] : memref<8x8xf32, #tpu.memory_space<vmem>>, vector<8x8xf32>
      %cst_11 = arith.constant 6.250000e-02 : f32
      %12 = vector.broadcast %cst_11 : f32 to vector<8x8xf32>
      %13 = arith.mulf %11, %12 : vector<8x8xf32>
      %c0_12 = arith.constant 0 : index
      %c0_13 = arith.constant 0 : index
      %14 = vector.load %arg3[%c0_12, %c0_13] : memref<8x256xf32, #tpu.memory_space<vmem>>, vector<8x256xf32>
      %cst_14 = arith.constant dense<0.000000e+00> : vector<8x256xf32>
      %15 = tpu.matmul %13, %14, %cst_14 {dimension_numbers = #tpu.dot_dimension_numbers<[1], [0], [0], [1], [0, 0, 1, 1], [], []>} : vector<8x8xf32>, vector<8x256xf32>, vector<8x256xf32> -> vector<8x256xf32>
      %c0_15 = arith.constant 0 : index
      %c0_16 = arith.constant 0 : index
      %16 = vector.load %arg4[%c0_15, %c0_16] : memref<1x256xf32, #tpu.memory_space<vmem>>, vector<1x256xf32>
      %17 = vector.broadcast %16 : vector<1x256xf32> to vector<8x256xf32>
      %18 = arith.addf %15, %17 : vector<8x256xf32>
      %cst_17 = arith.constant 0.000000e+00 : f32
      %19 = vector.broadcast %cst_17 : f32 to vector<8x256xf32>
      %20 = arith.maximumf %18, %19 : vector<8x256xf32>
      %c0_18 = arith.constant 0 : index
      %c0_19 = arith.constant 0 : index
      %21 = vector.load %arg5[%c0_18, %c0_19] : memref<256x128xf32, #tpu.memory_space<vmem>>, vector<256x128xf32>
      %cst_20 = arith.constant dense<0.000000e+00> : vector<8x128xf32>
      %22 = tpu.matmul %20, %21, %cst_20 {dimension_numbers = #tpu.dot_dimension_numbers<[1], [0], [0], [1], [0, 0, 1, 1], [], []>} : vector<8x256xf32>, vector<256x128xf32>, vector<8x128xf32> -> vector<8x128xf32>
      %c0_21 = arith.constant 0 : index
      %c0_22 = arith.constant 0 : index
      %23 = vector.load %arg6[%c0_21, %c0_22] : memref<1x128xf32, #tpu.memory_space<vmem>>, vector<1x128xf32>
      %24 = vector.broadcast %23 : vector<1x128xf32> to vector<8x128xf32>
      %25 = arith.addf %22, %24 : vector<8x128xf32>
      %c0_23 = arith.constant 0 : index
      %c0_24 = arith.constant 0 : index
      %26 = vector.load %arg7[%c0_23, %c0_24] : memref<8x128xf32, #tpu.memory_space<vmem>>, vector<8x128xf32>
      tpu.vector_store %arg7[%c0_23, %c0_24], %25 {strides = array<i32>} : memref<8x128xf32, #tpu.memory_space<vmem>>, vector<8x128xf32>,
    } else {
    }
    return
  }
  func.func @transform_0(%arg0: i32, %arg1: i32) -> (i32, i32, i32) {
    %c0_i32 = arith.constant 0 : i32
    %c0_i32_0 = arith.constant 0 : i32
    return %arg0, %arg1, %c0_i32 : i32, i32, i32
  }
  func.func @transform_1(%arg0: i32, %arg1: i32) -> (i32, i32) {
    %c0_i32 = arith.constant 0 : i32
    %c0_i32_0 = arith.constant 0 : i32
    %c0_i32_1 = arith.constant 0 : i32
    return %c0_i32, %c0_i32_0 : i32, i32
  }
  func.func @transform_2(%arg0: i32, %arg1: i32) -> (i32, i32) {
    %c0_i32 = arith.constant 0 : i32
    %c0_i32_0 = arith.constant 0 : i32
    %c0_i32_1 = arith.constant 0 : i32
    return %c0_i32, %c0_i32_0 : i32, i32
  }
  func.func @transform_3(%arg0: i32, %arg1: i32) -> (i32, i32) {
    %c0_i32 = arith.constant 0 : i32
    %c0_i32_0 = arith.constant 0 : i32
    %c0_i32_1 = arith.constant 0 : i32
    return %c0_i32, %c0_i32_0 : i32, i32
  }
  func.func @transform_4(%arg0: i32, %arg1: i32) -> (i32, i32) {
    %c0_i32 = arith.constant 0 : i32
    %c0_i32_0 = arith.constant 0 : i32
    %c0_i32_1 = arith.constant 0 : i32
    return %c0_i32, %c0_i32_0 : i32, i32
  }
  func.func @transform_5(%arg0: i32, %arg1: i32) -> (i32, i32) {
    %c0_i32 = arith.constant 0 : i32
    %c0_i32_0 = arith.constant 0 : i32
    return %arg0, %c0_i32 : i32, i32
  }
}

</mosaic_0001>

<llo_original>
// kernel: moment_forward.1
$region0: #{moment_forward.1}
  #allocation0 [shape = 'u32[]', space=smem, size = 0x4, offset = 0x4, fixed_abs, tag = 'smem constant byte address 0x4 - core index']
  #allocation1 [shape = 'u32[144,128]{1,0:T(1,128)}', space=vmem, size = 0x12000, scoped, tag = 'internal scratch']
  #allocation2 [shape = 'f32[8,8]{1,0:T(8,128)}', space=vmem, size = 0x1000, scoped, tag = 'scratch operand']
  %s0 = inlined_call_operand.vmem [shape: f32[8,16,8], index: 0, kind: input, shape index: {}]
  %s1 = inlined_call_operand.vmem [shape: f32[8,256], index: 1, kind: input, shape index: {}]
  %s2 = inlined_call_operand.vmem [shape: f32[1,256], index: 2, kind: input, shape index: {}]
  %s3 = inlined_call_operand.vmem [shape: f32[256,128], index: 3, kind: input, shape index: {}]
  %s4 = inlined_call_operand.vmem [shape: f32[1,128], index: 4, kind: input, shape index: {}]
  %s5 = inlined_call_operand.vmem [shape: f32[8,128], index: 5, kind: output, shape index: {}]
  %s6 = sld [smem:[#allocation0]]
  $region38: #{moment_forward.1} parent=0
    _
  %s8 = ssub.s32 1, %s6
  %s9 = scalar_select 0, %s8, %s6
  // Predicated region
  $region2: #{moment_forward.1} parent=0 // pred_check
    _
  $region3: #{moment_forward.1} parent=0 // pred_check_branch
    %11 = sbr.rel (0) target = $region5
  $region4: #{moment_forward.1} parent=0 // pred_region
    _
  $region5: #{moment_forward.1} parent=0 // pred_fallthru
    _
  // Predicated region
  $region6: #{moment_forward.1} parent=0 // pred_check
    _
  $region7: #{moment_forward.1} parent=0 // pred_check_branch
    %13 = sbr.rel (0) target = $region9
  $region8: #{moment_forward.1} parent=0 // pred_region
    _
  $region9: #{moment_forward.1} parent=0 // pred_fallthru
    _
  // Predicated region
  $region10: #{moment_forward.1} parent=0 // pred_check
    _
  $region11: #{moment_forward.1} parent=0 // pred_check_branch
    %15 = sbr.rel (0) target = $region13
  $region12: #{moment_forward.1} parent=0 // pred_region
    _
  $region13: #{moment_forward.1} parent=0 // pred_fallthru
    _
  // Predicated region
  $region14: #{moment_forward.1} parent=0 // pred_check
    _
  $region15: #{moment_forward.1} parent=0 // pred_check_branch
    %17 = sbr.rel (0) target = $region17
  $region16: #{moment_forward.1} parent=0 // pred_region
    _
  $region17: #{moment_forward.1} parent=0 // pred_fallthru
    _
  // Predicated region
  $region18: #{moment_forward.1} parent=0 // pred_check
    _
  $region19: #{moment_forward.1} parent=0 // pred_check_branch
    %19 = sbr.rel (0) target = $region21
  $region20: #{moment_forward.1} parent=0 // pred_region
    _
  $region21: #{moment_forward.1} parent=0 // pred_fallthru
    _
  %p20 = scmp.eq.s32.totalorder 0, 0
  // Predicated region
  $region22: #{moment_forward.1} parent=0 // pred_check
    %p21 = pneg %p20
  $region23: #{moment_forward.1} parent=0 // pred_check_branch
    %23 = sbr.rel (%p21) target = $region25
  $region24: #{moment_forward.1} parent=0 // pred_region
    %vm24 = vcmask 64512
    %25 = vst.msk [vmem:[#allocation2] sm:$0xff] %vm24, 0.0
  $region25: #{moment_forward.1} parent=0 // pred_fallthru
    _
  %v26 = vld [vmem:[%s0] sm:$0xff]
  %v27 = vld [vmem:[%s0 + $0x8] sm:$0xff]
  %v28 = vld [vmem:[%s0 + $0x10] sm:$0xff]
  %v29 = vld [vmem:[%s0 + $0x18] sm:$0xff]
  %v30 = vld [vmem:[%s0 + $0x20] sm:$0xff]
  %v31 = vld [vmem:[%s0 + $0x28] sm:$0xff]
  %v32 = vld [vmem:[%s0 + $0x30] sm:$0xff]
  %v33 = vld [vmem:[%s0 + $0x38] sm:$0xff]
  %v34 = vld [vmem:[%s0 + $0x40] sm:$0xff]
  %v35 = vld [vmem:[%s0 + $0x48] sm:$0xff]
  %v36 = vld [vmem:[%s0 + $0x50] sm:$0xff]
  %v37 = vld [vmem:[%s0 + $0x58] sm:$0xff]
  %v38 = vld [vmem:[%s0 + $0x60] sm:$0xff]
  %v39 = vld [vmem:[%s0 + $0x68] sm:$0xff]
  %v40 = vld [vmem:[%s0 + $0x70] sm:$0xff]
  %v41 = vld [vmem:[%s0 + $0x78] sm:$0xff]
  %v42 = vld [vmem:[#allocation2] sm:$0xff]
  %vm43 = vcmask 64512
  %v44 = vsel %vm43, %v26, 0.0
  %v45 = vsel %vm43, %v27, 0.0
  %v46 = vadd.f32 %v44, %v45
  %v47 = vrot.slane %v46, 4
  %v48 = vadd.f32 %v46, %v47
  %v49 = vrot.slane %v48, 2
  %v50 = vadd.f32 %v48, %v49
  %v51 = vrot.slane %v50, 1
  %v52 = vadd.f32 %v50, %v51
  %v53 = vsel %vm43, %v28, 0.0
  %v54 = vsel %vm43, %v29, 0.0
  %v55 = vadd.f32 %v53, %v54
  %v56 = vrot.slane %v55, 4
  %v57 = vadd.f32 %v55, %v56
  %v58 = vrot.slane %v57, 2
  %v59 = vadd.f32 %v57, %v58
  %v60 = vrot.slane %v59, 1
  %v61 = vadd.f32 %v59, %v60
  %v62 = vsel %vm43, %v30, 0.0
  %v63 = vsel %vm43, %v31, 0.0
  %v64 = vadd.f32 %v62, %v63
  %v65 = vrot.slane %v64, 4
  %v66 = vadd.f32 %v64, %v65
  %v67 = vrot.slane %v66, 2
  %v68 = vadd.f32 %v66, %v67
  %v69 = vrot.slane %v68, 1
  %v70 = vadd.f32 %v68, %v69
  %v71 = vsel %vm43, %v32, 0.0
  %v72 = vsel %vm43, %v33, 0.0
  %v73 = vadd.f32 %v71, %v72
  %v74 = vrot.slane %v73, 4
  %v75 = vadd.f32 %v73, %v74
  %v76 = vrot.slane %v75, 2
  %v77 = vadd.f32 %v75, %v76
  %v78 = vrot.slane %v77, 1
  %v79 = vadd.f32 %v77, %v78
  %v80 = vsel %vm43, %v34, 0.0
  %v81 = vsel %vm43, %v35, 0.0
  %v82 = vadd.f32 %v80, %v81
  %v83 = vrot.slane %v82, 4
  %v84 = vadd.f32 %v82, %v83
  %v85 = vrot.slane %v84, 2
  %v86 = vadd.f32 %v84, %v85
  %v87 = vrot.slane %v86, 1
  %v88 = vadd.f32 %v86, %v87
  %v89 = vsel %vm43, %v36, 0.0
  %v90 = vsel %vm43, %v37, 0.0
  %v91 = vadd.f32 %v89, %v90
  %v92 = vrot.slane %v91, 4
  %v93 = vadd.f32 %v91, %v92
  %v94 = vrot.slane %v93, 2
  %v95 = vadd.f32 %v93, %v94
  %v96 = vrot.slane %v95, 1
  %v97 = vadd.f32 %v95, %v96
  %v98 = vsel %vm43, %v38, 0.0
  %v99 = vsel %vm43, %v39, 0.0
  %v100 = vadd.f32 %v98, %v99
  %v101 = vrot.slane %v100, 4
  %v102 = vadd.f32 %v100, %v101
  %v103 = vrot.slane %v102, 2
  %v104 = vadd.f32 %v102, %v103
  %v105 = vrot.slane %v104, 1
  %v106 = vadd.f32 %v104, %v105
  %v107 = vsel %vm43, %v40, 0.0
  %v108 = vsel %vm43, %v41, 0.0
  %v109 = vadd.f32 %v107, %v108
  %v110 = vrot.slane %v109, 4
  %v111 = vadd.f32 %v109, %v110
  %v112 = vrot.slane %v111, 2
  %v113 = vadd.f32 %v111, %v112
  %v114 = vrot.slane %v113, 1
  %v115 = vadd.f32 %v113, %v114
  %vm124 = vcmask 1041409
  %v125 = vsel %vm124, %v61, %v52
  %vm126 = vcmask 1042434
  %v127 = vsel %vm126, %v70, %v125
  %vm128 = vcmask 1043459
  %v129 = vsel %vm128, %v79, %v127
  %vm130 = vcmask 1044484
  %v131 = vsel %vm130, %v88, %v129
  %vm132 = vcmask 1045509
  %v133 = vsel %vm132, %v97, %v131
  %vm134 = vcmask 1046534
  %v135 = vsel %vm134, %v106, %v133
  %vm136 = vcmask 1047559
  %v137 = vsel %vm136, %v115, %v135
  %v139 = vadd.f32 %v42, %v137
  %140 = vst.msk [vmem:[#allocation2] sm:$0xff] %vm43, %v139
  // Predicated region
  $region26: #{moment_forward.1} parent=0 // pred_check
    %p141 = pneg %p20
  $region27: #{moment_forward.1} parent=0 // pred_check_branch
    %143 = sbr.rel (%p141) target = $region29
  $region28: #{moment_forward.1} parent=0 // pred_region
    %v144 = vld [vmem:[#allocation2] sm:$0xff]
    %v145 = vmul.f32 %v144, 0.0625
    %v146 = vld [vmem:[%s1] sm:$0xff]
    %v147 = vld [vmem:[%s1 + $0x8] sm:$0xff]
    %v148 = vld [vmem:[%s2] sm:$0x3]
    %v150 = vlaneseq
    %v151 = vshrl.u32 %v150, 7
    %v152 = vsub.s32 0, %v151
    %v153 = vrot.slane %v148, %v152
    %v154 = vlaneseq
    %v155 = vshrl.u32 %v154, 7
    %v156 = vsub.s32 1, %v155
    %v157 = vrot.slane %v148, %v156
    %v161 = vsel %vm43, %v145, 0
    %163 = vmatprep.subr.mxu0 %v147
    %164 = vmatpush1.msra.mxu0 %v146
    %165 = vmatprep.subr.mxu0 0.0
    %166 = vmatpush1.msra.mxu0 0.0
    %167 = vmatprep.subr.mxu0 0.0
    %168 = vmatpush1.msra.mxu0 0.0
    %169 = vmatprep.subr.mxu0 0.0
    %170 = vmatpush1.msra.mxu0 0.0
    %171 = vmatprep.subr.mxu0 0.0
    %172 = vmatpush1.msra.mxu0 0.0
    %173 = vmatprep.subr.mxu0 0.0
    %174 = vmatpush1.msra.mxu0 0.0
    %175 = vmatprep.subr.mxu0 0.0
    %176 = vmatpush1.msra.mxu0 0.0
    %177 = vmatprep.subr.mxu0 0.0
    %178 = vmatpush1.msra.mxu0 0.0
    %179 = vmatprep.subr.mxu0 0.0
    %180 = vmatpush1.msra.mxu0 0.0
    %181 = vmatprep.subr.mxu0 0.0
    %182 = vmatpush1.msra.mxu0 0.0
    %183 = vmatprep.subr.mxu0 0.0
    %184 = vmatpush1.msra.mxu0 0.0
    %185 = vmatprep.subr.mxu0 0.0
    %186 = vmatpush1.msra.mxu0 0.0
    %187 = vmatprep.subr.mxu0 0.0
    %188 = vmatpush1.msra.mxu0 0.0
    %189 = vmatprep.subr.mxu0 0.0
    %190 = vmatpush1.msra.mxu0 0.0
    %191 = vmatprep.subr.mxu0 0.0
    %192 = vmatpush1.msra.mxu0 0.0
    %193 = vmatprep.subr.mxu0 0.0
    %194 = vmatpush1.msra.mxu0 0.0
    %195 = vmatprep.subr.mxu0 0.0
    %196 = vmatpush1.msra.mxu0 0.0
    %197 = vmatprep.subr.mxu0 0.0
    %198 = vmatpush1.msra.mxu0 0.0
    %199 = vmatprep.subr.mxu0 0.0
    %200 = vmatpush1.msra.mxu0 0.0
    %201 = vmatprep.subr.mxu0 0.0
    %202 = vmatpush1.msra.mxu0 0.0
    %203 = vmatprep.subr.mxu0 0.0
    %204 = vmatpush1.msra.mxu0 0.0
    %205 = vmatprep.subr.mxu0 0.0
    %206 = vmatpush1.msra.mxu0 0.0
    %207 = vmatprep.subr.mxu0 0.0
    %208 = vmatpush1.msra.mxu0 0.0
    %209 = vmatprep.subr.mxu0 0.0
    %210 = vmatpush1.msra.mxu0 0.0
    %211 = vmatprep.subr.mxu0 0.0
    %212 = vmatpush1.msra.mxu0 0.0
    %213 = vmatprep.subr.mxu0 0.0
    %214 = vmatpush1.msra.mxu0 0.0
    %215 = vmatprep.subr.mxu0 0.0
    %216 = vmatpush1.msra.mxu0 0.0
    %217 = vmatprep.subr.mxu0 0.0
    %218 = vmatpush1.msra.mxu0 0.0
    %219 = vmatprep.subr.mxu0 0.0
    %220 = vmatpush1.msra.mxu0 0.0
    %221 = vmatprep.subr.mxu0 0.0
    %222 = vmatpush1.msra.mxu0 0.0
    %223 = vmatprep.subr.mxu0 0.0
    %224 = vmatpush1.msra.mxu0 0.0
    %225 = vmatprep.subr.mxu0 0.0
    %226 = vmatpush1.msra.mxu0 0.0
    %227 = vmatprep.mubr.f32.mxu0 0.0
    %228 = vmatmul.mubr.f32.gmra.mrb[0].mxu0 %v161
    %v229 = vpop.f32.mrb[0].mxu0
    %v230 = vadd.f32 %v153, %v229
    %v231 = vpop.f32.mrb[0].mxu0
    %v232 = vadd.f32 %v157, %v231
    %233 = vdwg.mxu0
    %v234 = vmax.f32 %v230, 0.0
    %v235 = vmax.f32 %v232, 0.0
    %v236 = vld [vmem:[%s3] sm:$0xff]
    %v237 = vld [vmem:[%s3 + $0x8] sm:$0xff]
    %v238 = vld [vmem:[%s3 + $0x10] sm:$0xff]
    %v239 = vld [vmem:[%s3 + $0x18] sm:$0xff]
    %v240 = vld [vmem:[%s3 + $0x20] sm:$0xff]
    %v241 = vld [vmem:[%s3 + $0x28] sm:$0xff]
    %v242 = vld [vmem:[%s3 + $0x30] sm:$0xff]
    %v243 = vld [vmem:[%s3 + $0x38] sm:$0xff]
    %v244 = vld [vmem:[%s3 + $0x40] sm:$0xff]
    %v245 = vld [vmem:[%s3 + $0x48] sm:$0xff]
    %v246 = vld [vmem:[%s3 + $0x50] sm:$0xff]
    %v247 = vld [vmem:[%s3 + $0x58] sm:$0xff]
    %v248 = vld [vmem:[%s3 + $0x60] sm:$0xff]
    %v249 = vld [vmem:[%s3 + $0x68] sm:$0xff]
    %v250 = vld [vmem:[%s3 + $0x70] sm:$0xff]
    %v251 = vld [vmem:[%s3 + $0x78] sm:$0xff]
    %v252 = vld [vmem:[%s3 + $0x80] sm:$0xff]
    %v253 = vld [vmem:[%s3 + $0x88] sm:$0xff]
    %v254 = vld [vmem:[%s3 + $0x90] sm:$0xff]
    %v255 = vld [vmem:[%s3 + $0x98] sm:$0xff]
    %v256 = vld [vmem:[%s3 + $0xa0] sm:$0xff]
    %v257 = vld [vmem:[%s3 + $0xa8] sm:$0xff]
    %v258 = vld [vmem:[%s3 + $0xb0] sm:$0xff]
    %v259 = vld [vmem:[%s3 + $0xb8] sm:$0xff]
    %v260 = vld [vmem:[%s3 + $0xc0] sm:$0xff]
    %v261 = vld [vmem:[%s3 + $0xc8] sm:$0xff]
    %v262 = vld [vmem:[%s3 + $0xd0] sm:$0xff]
    %v263 = vld [vmem:[%s3 + $0xd8] sm:$0xff]
    %v264 = vld [vmem:[%s3 + $0xe0] sm:$0xff]
    %v265 = vld [vmem:[%s3 + $0xe8] sm:$0xff]
    %v266 = vld [vmem:[%s3 + $0xf0] sm:$0xff]
    %v267 = vld [vmem:[%s3 + $0xf8] sm:$0xff]
    %v268 = vld [vmem:[%s4] sm:$0x1]
    %v270 = vlaneseq
    %v271 = vshrl.u32 %v270, 7
    %v272 = vsub.s32 0, %v271
    %v273 = vrot.slane %v268, %v272
    %275 = vmatprep.subr.mxu0 0.0
    %276 = vmatpush1.msra.mxu0 %v236
    %277 = vmatprep.subr.mxu0 0.0
    %278 = vmatpush1.msra.mxu0 %v237
    %279 = vmatprep.subr.mxu0 0.0
    %280 = vmatpush1.msra.mxu0 %v238
    %281 = vmatprep.subr.mxu0 0.0
    %282 = vmatpush1.msra.mxu0 %v239
    %283 = vmatprep.subr.mxu0 0.0
    %284 = vmatpush1.msra.mxu0 %v240
    %285 = vmatprep.subr.mxu0 0.0
    %286 = vmatpush1.msra.mxu0 %v241
    %287 = vmatprep.subr.mxu0 0.0
    %288 = vmatpush1.msra.mxu0 %v242
    %289 = vmatprep.subr.mxu0 0.0
    %290 = vmatpush1.msra.mxu0 %v243
    %291 = vmatprep.subr.mxu0 0.0
    %292 = vmatpush1.msra.mxu0 %v244
    %293 = vmatprep.subr.mxu0 0.0
    %294 = vmatpush1.msra.mxu0 %v245
    %295 = vmatprep.subr.mxu0 0.0
    %296 = vmatpush1.msra.mxu0 %v246
    %297 = vmatprep.subr.mxu0 0.0
    %298 = vmatpush1.msra.mxu0 %v247
    %299 = vmatprep.subr.mxu0 0.0
    %300 = vmatpush1.msra.mxu0 %v248
    %301 = vmatprep.subr.mxu0 0.0
    %302 = vmatpush1.msra.mxu0 %v249
    %303 = vmatprep.subr.mxu0 0.0
    %304 = vmatpush1.msra.mxu0 %v250
    %305 = vmatprep.subr.mxu0 0.0
    %306 = vmatpush1.msra.mxu0 %v251
    %307 = vmatprep.subr.mxu0 0.0
    %308 = vmatpush1.msra.mxu0 %v252
    %309 = vmatprep.subr.mxu0 0.0
    %310 = vmatpush1.msra.mxu0 %v253
    %311 = vmatprep.subr.mxu0 0.0
    %312 = vmatpush1.msra.mxu0 %v254
    %313 = vmatprep.subr.mxu0 0.0
    %314 = vmatpush1.msra.mxu0 %v255
    %315 = vmatprep.subr.mxu0 0.0
    %316 = vmatpush1.msra.mxu0 %v256
    %317 = vmatprep.subr.mxu0 0.0
    %318 = vmatpush1.msra.mxu0 %v257
    %319 = vmatprep.subr.mxu0 0.0
    %320 = vmatpush1.msra.mxu0 %v258
    %321 = vmatprep.subr.mxu0 0.0
    %322 = vmatpush1.msra.mxu0 %v259
    %323 = vmatprep.subr.mxu0 0.0
    %324 = vmatpush1.msra.mxu0 %v260
    %325 = vmatprep.subr.mxu0 0.0
    %326 = vmatpush1.msra.mxu0 %v261
    %327 = vmatprep.subr.mxu0 0.0
    %328 = vmatpush1.msra.mxu0 %v262
    %329 = vmatprep.subr.mxu0 0.0
    %330 = vmatpush1.msra.mxu0 %v263
    %331 = vmatprep.subr.mxu0 0.0
    %332 = vmatpush1.msra.mxu0 %v264
    %333 = vmatprep.subr.mxu0 0.0
    %334 = vmatpush1.msra.mxu0 %v265
    %335 = vmatprep.subr.mxu0 0.0
    %336 = vmatpush1.msra.mxu0 %v266
    %337 = vmatprep.subr.mxu0 0.0
    %338 = vmatpush1.msra.mxu0 %v267
    %339 = vmatprep.mubr.f32.mxu0 %v235
    %340 = vmatmul.mubr.f32.gmra.mrb[0].mxu0 %v234
    %v341 = vpop.f32.mrb[0].mxu0
    %v342 = vadd.f32 %v273, %v341
    %v343 = vpop.f32.mrb[0].mxu0
    %344 = vdwg.mxu0
    %345 = vst [vmem:[%s5] sm:$0xff] %v342
  $region29: #{moment_forward.1} parent=0 // pred_fallthru
    _
  // Predicated region
  $region30: #{moment_forward.1} parent=0 // pred_check
    _
  $region31: #{moment_forward.1} parent=0 // pred_check_branch
    %347 = sbr.rel (0) target = $region33
  $region32: #{moment_forward.1} parent=0 // pred_region
    _
  $region33: #{moment_forward.1} parent=0 // pred_fallthru
    _
  // Predicated region
  $region34: #{moment_forward.1} parent=0 // pred_check
    _
  $region35: #{moment_forward.1} parent=0 // pred_check_branch
    %349 = sbr.rel (0) target = $region37
  $region36: #{moment_forward.1} parent=0 // pred_region
    _
  $region37: #{moment_forward.1} parent=0 // pred_fallthru
    _

</llo_original>
